<compile_context>
chip_gen: v6e
topology: v6e:2x2x1
jax: 0.10.0
libtpu: 0.0.40
codegen_flags: <defaults>
</compile_context>

<pallas_src>
import jax
import jax.numpy as jnp
from jax.experimental import pallas as pl
from jax.experimental.pallas import tpu as pltpu

PAST_SIZE = 3
IN_FEATURES = PAST_SIZE + 1   # 4
OUT_FEATURES = 1

LANE = 128                    # TPU lane width
GROUPS = 8                    # sublane groups per block (one (8,128) tile each)
PACK_QUANTUM = GROUPS * LANE  # batch padding quantum = 1024

# Max lane-columns per grid step.  Each step covers GROUPS * tb batch elements.
# tb = 65536: input block 32*tb*4 = 8 MiB, output 8*tb*4 = 2 MiB, double
# buffered ~20 MiB -> covered by vmem_limit_bytes below on v5e/v6e/v7x.
MAX_BLOCK_LANES = 65536
VMEM_LIMIT_BYTES = 32 * 1024 * 1024


def _round_up(x, m):
    return ((x + m - 1) // m) * m


def _choose_block_lanes(cols, max_block_lanes):
    # At least 2 grid steps when cols allows it (v7x has 2 TensorCores),
    # capped by the VMEM budget.  cols is always a multiple of LANE.
    half = _round_up((cols + 1) // 2, LANE)
    return max(LANE, min(max_block_lanes, half))


def _linear_kernel(params_ref, x_ref, o_ref):
    # params_ref: SMEM (5,) f32 = [w0, w1, w2, w3, b]
    # x_ref:      VMEM (32, tb) f32 — rows [8f : 8f+8] hold feature f of the
    #             8 batch-groups (sublane-dense, tile-aligned slabs)
    # o_ref:      VMEM (8, tb)  f32 — row g = outputs of batch-group g
    x0 = x_ref[0:8, :]
    x1 = x_ref[8:16, :]
    x2 = x_ref[16:24, :]
    x3 = x_ref[24:32, :]
    o_ref[...] = (x0 * params_ref[0]
                  + x1 * params_ref[1]
                  + x2 * params_ref[2]
                  + x3 * params_ref[3]
                  + params_ref[4])


def pack_inputs(x):
    """(B, 4) f32 -> ((32, cols) packed activation, b_pad).

    packed[f*8 + g, c] = x_padded[g*cols + c, f]   with cols = b_pad // 8.
    """
    B, F = x.shape
    assert F == IN_FEATURES
    b_pad = _round_up(max(B, 1), PACK_QUANTUM)
    cols = b_pad // GROUPS
    xp = jnp.pad(x.astype(jnp.float32), ((0, b_pad - B), (0, 0)))
    packed = (xp.reshape(GROUPS, cols, IN_FEATURES)
                .transpose(2, 0, 1)
                .reshape(GROUPS * IN_FEATURES, cols))
    return packed, b_pad


def controls_predictor_forward_packed(x_packed, weight, bias, *,
                                      max_block_lanes=MAX_BLOCK_LANES):
    """Kernel entry for producers that already emit the packed (32, cols)
    layout (avoids the wrapper relayout pass).  Returns (8, cols) f32 where
    out[g, c] = y[g*cols + c]."""
    assert weight.shape == (OUT_FEATURES, IN_FEATURES)
    assert bias.shape == (OUT_FEATURES,)
    rows, cols = x_packed.shape
    assert rows == GROUPS * IN_FEATURES and cols % LANE == 0

    params = jnp.concatenate(
        [weight.reshape(-1), bias.reshape(-1)]).astype(jnp.float32)

    tb = _choose_block_lanes(cols, max_block_lanes)
    grid_steps = (cols + tb - 1) // tb

    in_bytes = GROUPS * IN_FEATURES * cols * 4
    out_bytes = GROUPS * cols * 4
    cost = pl.CostEstimate(
        flops=8 * GROUPS * cols,          # 4 mul + 3 add + bias per output
        transcendentals=0,
        bytes_accessed=in_bytes + out_bytes + params.size * 4,
    )

    return pl.pallas_call(
        _linear_kernel,
        out_shape=jax.ShapeDtypeStruct((GROUPS, cols), jnp.float32),
        grid=(grid_steps,),
        in_specs=[
            # 5 scalar parameters: SMEM, no blocking, no per-step DMA.
            pl.BlockSpec(memory_space=pltpu.MemorySpace.SMEM),
            # (32, tb): four tile-aligned 8-sublane feature slabs.
            pl.BlockSpec((GROUPS * IN_FEATURES, tb), lambda i: (0, i)),
        ],
        # (8, tb): sublane- and lane-dense output slab (unmasked stores).
        out_specs=pl.BlockSpec((GROUPS, tb), lambda i: (0, i)),
        compiler_params=pltpu.CompilerParams(
            dimension_semantics=("parallel",),
            vmem_limit_bytes=VMEM_LIMIT_BYTES,
        ),
        cost_estimate=cost,
    )(params, x_packed)


def controls_predictor_forward(x, weight, bias, *,
                               max_block_lanes=MAX_BLOCK_LANES):
    """Pallas implementation of ControlsPredictor.forward.

    x:      (B, 4) float32
    weight: (1, 4) float32   (nn.Linear weight)
    bias:   (1,)   float32   (nn.Linear bias)
    returns (B, 1) float32  ==  x @ weight.T + bias
    """
    B, F = x.shape
    assert F == IN_FEATURES
    assert weight.shape == (OUT_FEATURES, IN_FEATURES)
    assert bias.shape == (OUT_FEATURES,)
    if B == 0:
        return jnp.zeros((0, OUT_FEATURES), jnp.float32)

    # TODO(synk): have the producer emit this packed layout directly (or rely
    # on XLA fusion for tiny B) to avoid this extra relayout pass over x.
    x_packed, b_pad = pack_inputs(x)
    out_packed = controls_predictor_forward_packed(
        x_packed, weight, bias, max_block_lanes=max_block_lanes)

    # Layout plumbing back to nn.Linear's (B, 1), wrapper-side.
    return out_packed.reshape(b_pad)[:B].reshape(B, OUT_FEATURES)


if __name__ == "__main__":
    key = jax.random.PRNGKey(0)
    kx, kw, kb, kx2 = jax.random.split(key, 4)

    # Deterministic parameter init mimicking nn.Linear default:
    # uniform(-1/sqrt(in_features), 1/sqrt(in_features))
    bound = 1.0 / jnp.sqrt(jnp.float32(IN_FEATURES))
    weight = jax.random.uniform(
        kw, (OUT_FEATURES, IN_FEATURES), minval=-bound, maxval=bound,
        dtype=jnp.float32)
    bias = jax.random.uniform(
        kb, (OUT_FEATURES,), minval=-bound, maxval=bound, dtype=jnp.float32)

    # Small batch of past-window feature vectors (matches the module's usage).
    B = 8
    x = jax.random.normal(kx, (B, IN_FEATURES), dtype=jnp.float32)
    out = jax.block_until_ready(controls_predictor_forward(x, weight, bias))
    ref = x @ weight.T + bias[None, :]
    assert out.shape == (B, OUT_FEATURES)
    assert jnp.allclose(out, ref, atol=1e-5, rtol=1e-5)

    # Second check: exercises multi-step grid, ragged final block and the
    # padded-batch unpack path.
    B2 = 2500
    x2 = jax.random.normal(kx2, (B2, IN_FEATURES), dtype=jnp.float32)
    out2 = jax.block_until_ready(controls_predictor_forward(x2, weight, bias))
    ref2 = x2 @ weight.T + bias[None, :]
    assert out2.shape == (B2, OUT_FEATURES)
    assert jnp.allclose(out2, ref2, atol=1e-5, rtol=1e-5)

    print("KERNEL_OK")
</pallas_src>

<mosaic_0001>
module attributes {stable_mosaic.version = 11 : i64} {
  func.func @_linear_kernel(%arg0: i32, %arg1: memref<5xf32, #tpu.memory_space<smem>>, %arg2: memref<32x128xf32, #tpu.memory_space<vmem>>, %arg3: memref<8x128xf32, #tpu.memory_space<vmem>>) attributes {dimension_semantics = [#tpu.dimension_semantics<parallel>], iteration_bounds = array<i64: 1>, scalar_prefetch = 0 : i64, scratch_operands = 0 : i64, tpu.core_type = #tpu.core_type<tc>, window_params = [{transform_indices = @transform_0, window_bounds = array<i64: 5>}, {transform_indices = @transform_1, window_bounds = array<i64: 32, 128>}, {transform_indices = @transform_2, window_bounds = array<i64: 8, 128>}]} {
    %c0 = arith.constant 0 : index
    %c0_0 = arith.constant 0 : index
    %0 = vector.load %arg2[%c0, %c0_0] : memref<32x128xf32, #tpu.memory_space<vmem>>, vector<8x128xf32>
    %c8 = arith.constant 8 : index
    %c0_1 = arith.constant 0 : index
    %1 = vector.load %arg2[%c8, %c0_1] : memref<32x128xf32, #tpu.memory_space<vmem>>, vector<8x128xf32>
    %c16 = arith.constant 16 : index
    %c0_2 = arith.constant 0 : index
    %2 = vector.load %arg2[%c16, %c0_2] : memref<32x128xf32, #tpu.memory_space<vmem>>, vector<8x128xf32>
    %c24 = arith.constant 24 : index
    %c0_3 = arith.constant 0 : index
    %3 = vector.load %arg2[%c24, %c0_3] : memref<32x128xf32, #tpu.memory_space<vmem>>, vector<8x128xf32>
    %c0_4 = arith.constant 0 : index
    %4 = memref.load %arg1[%c0_4] : memref<5xf32, #tpu.memory_space<smem>>
    %5 = vector.broadcast %4 : f32 to vector<8x128xf32>
    %6 = arith.mulf %0, %5 : vector<8x128xf32>
    %c1 = arith.constant 1 : index
    %7 = memref.load %arg1[%c1] : memref<5xf32, #tpu.memory_space<smem>>
    %8 = vector.broadcast %7 : f32 to vector<8x128xf32>
    %9 = arith.mulf %1, %8 : vector<8x128xf32>
    %10 = arith.addf %6, %9 : vector<8x128xf32>
    %c2 = arith.constant 2 : index
    %11 = memref.load %arg1[%c2] : memref<5xf32, #tpu.memory_space<smem>>
    %12 = vector.broadcast %11 : f32 to vector<8x128xf32>
    %13 = arith.mulf %2, %12 : vector<8x128xf32>
    %14 = arith.addf %10, %13 : vector<8x128xf32>
    %c3 = arith.constant 3 : index
    %15 = memref.load %arg1[%c3] : memref<5xf32, #tpu.memory_space<smem>>
    %16 = vector.broadcast %15 : f32 to vector<8x128xf32>
    %17 = arith.mulf %3, %16 : vector<8x128xf32>
    %18 = arith.addf %14, %17 : vector<8x128xf32>
    %c4 = arith.constant 4 : index
    %19 = memref.load %arg1[%c4] : memref<5xf32, #tpu.memory_space<smem>>
    %20 = vector.broadcast %19 : f32 to vector<8x128xf32>
    %21 = arith.addf %18, %20 : vector<8x128xf32>
    %c0_5 = arith.constant 0 : index
    %c0_6 = arith.constant 0 : index
    %22 = vector.load %arg3[%c0_5, %c0_6] : memref<8x128xf32, #tpu.memory_space<vmem>>, vector<8x128xf32>
    tpu.vector_store %arg3[%c0_5, %c0_6], %21 {strides = array<i32>} : memref<8x128xf32, #tpu.memory_space<vmem>>, vector<8x128xf32>,
    return
  }
  func.func @transform_0(%arg0: i32) -> i32 {
    %c0_i32 = arith.constant 0 : i32
    %c0_i32_0 = arith.constant 0 : i32
    return %c0_i32 : i32
  }
  func.func @transform_1(%arg0: i32) -> (i32, i32) {
    %c0_i32 = arith.constant 0 : i32
    %c0_i32_0 = arith.constant 0 : i32
    return %c0_i32, %arg0 : i32, i32
  }
  func.func @transform_2(%arg0: i32) -> (i32, i32) {
    %c0_i32 = arith.constant 0 : i32
    %c0_i32_0 = arith.constant 0 : i32
    return %c0_i32, %arg0 : i32, i32
  }
}

</mosaic_0001>

<llo_original>
// kernel: tpu_custom_call.1
$region0: #{tpu_custom_call.1}
  #allocation0 [shape = 'u32[]', space=smem, size = 0x4, offset = 0x4, fixed_abs, tag = 'smem constant byte address 0x4 - core index']
  #allocation1 [shape = 'u32[144,128]{1,0:T(1,128)}', space=vmem, size = 0x12000, scoped, tag = 'internal scratch']
  %s0 = inlined_call_operand.hbm [shape: f32[5], index: 0, kind: input, shape index: {}]
  %s1 = inlined_call_operand.hbm [shape: f32[32,128], index: 1, kind: input, shape index: {}]
  %s2 = inlined_call_operand.hbm [shape: f32[8,128], index: 2, kind: output, shape index: {}]
  %s3 = sld [smem:[#allocation0]]
  $region26: #{tpu_custom_call.1} parent=0
    _
  %s5 = ssub.s32 1, %s3
  %s6 = scalar_select 0, %s5, %s3
  $region1: #{tpu_custom_call.1} parent=0
    #allocation2 [shape = 'u8[512]{0}', space=smem, size = 0x200, scoped, tag = 'input window, operand 0, single buffered']
    #allocation3 [shape = 's32[1]{0}', space=sflag, size = 0x4, scoped, tag = 'scoped memory for tpu_custom_call.1']
    #allocation4 [shape = 's32[1]{0}', space=sflag, size = 0x4, scoped, tag = 'scoped memory for tpu_custom_call.1']
    #allocation5 [shape = 's32[1]{0}', space=sflag, size = 0x4, scoped, tag = 'scoped memory for tpu_custom_call.1']
    #allocation6 [shape = 'u8[16384]{0}', space=vmem, size = 0x4000, scoped, tag = 'input window, operand 1, single buffered']
    #allocation7 [shape = 'u8[4096]{0}', space=vmem, size = 0x1000, scoped, tag = 'output window, operand 0, single buffered']
    %7 = vsyncpa [#allocation5], 0
    %8 = vsyncpa [#allocation3], 0
    %9 = vsyncpa [#allocation4], 0
    // Predicated region
    $region2: #{tpu_custom_call.1} parent=1 // pred_check
      _
    $region3: #{tpu_custom_call.1} parent=1 // pred_check_branch
      %11 = sbr.rel (0) target = $region5
    $region4: #{tpu_custom_call.1} parent=1 // pred_region
      %s13 = ssub.s32 16, 16
      %14 = vsyncadd [#allocation5], %s13
      %17 = dma.hbm_to_smem %s0, 16, [#allocation2], [#allocation5]
    $region5: #{tpu_custom_call.1} parent=1 // pred_fallthru
      _
    // Predicated region
    $region6: #{tpu_custom_call.1} parent=1 // pred_check
      _
    $region7: #{tpu_custom_call.1} parent=1 // pred_check_branch
      %19 = sbr.rel (0) target = $region9
    $region8: #{tpu_custom_call.1} parent=1 // pred_region
      %s21 = ssub.s32 512, 512
      %22 = vsyncadd [#allocation3], %s21
      %s23 = sshll.u32 [#allocation6], 4
      %s24 = int_to_ptr.vmem [resolvable:$true] %s23
      %29 = dma.hbm_to_vmem [thread:$0]  %s1, 512, %s24, [#allocation3], 128, 128, 8
    $region9: #{tpu_custom_call.1} parent=1 // pred_fallthru
      _
    // Predicated region
    $region10: #{tpu_custom_call.1} parent=1 // pred_check
      _
    $region11: #{tpu_custom_call.1} parent=1 // pred_check_branch
      %31 = sbr.rel (0) target = $region13
    $region12: #{tpu_custom_call.1} parent=1 // pred_region
      %32 = dma.done [#allocation5], 16
    $region13: #{tpu_custom_call.1} parent=1 // pred_fallthru
      _
    // Predicated region
    $region14: #{tpu_custom_call.1} parent=1 // pred_check
      _
    $region15: #{tpu_custom_call.1} parent=1 // pred_check_branch
      %34 = sbr.rel (0) target = $region17
    $region16: #{tpu_custom_call.1} parent=1 // pred_region
      %35 = dma.done [#allocation3], 512
    $region17: #{tpu_custom_call.1} parent=1 // pred_fallthru
      _
    %36 = sfence
    %v37 = vld [vmem:[#allocation6] sm:$0xff]
    %v38 = vld [vmem:[#allocation6 + $0x8] sm:$0xff]
    %v39 = vld [vmem:[#allocation6 + $0x10] sm:$0xff]
    %v40 = vld [vmem:[#allocation6 + $0x18] sm:$0xff]
    %s41 = sld [smem:[#allocation2]]
    %v42 = vstv %s41
    %v43 = vmul.f32 %v37, %v42
    %s44 = sld [smem:[#allocation2 + $0x1]]
    %v45 = vstv %s44
    %v46 = vmul.f32 %v38, %v45
    %v47 = vadd.f32 %v43, %v46
    %s48 = sld [smem:[#allocation2 + $0x2]]
    %v49 = vstv %s48
    %v50 = vmul.f32 %v39, %v49
    %v51 = vadd.f32 %v47, %v50
    %s52 = sld [smem:[#allocation2 + $0x3]]
    %v53 = vstv %s52
    %v54 = vmul.f32 %v40, %v53
    %v55 = vadd.f32 %v51, %v54
    %s56 = sld [smem:[#allocation2 + $0x4]]
    %v57 = vstv %s56
    %v58 = vadd.f32 %v55, %v57
    %59 = vst [vmem:[#allocation7] sm:$0xff] %v58
    // Predicated region
    $region18: #{tpu_custom_call.1} parent=1 // pred_check
      _
    $region19: #{tpu_custom_call.1} parent=1 // pred_check_branch
      %61 = sbr.rel (0) target = $region21
    $region20: #{tpu_custom_call.1} parent=1 // pred_region
      %s63 = ssub.s32 128, 128
      %64 = vsyncadd [#allocation4], %s63
      %s66 = sshll.u32 [#allocation7], 4
      %s67 = int_to_ptr.vmem [resolvable:$true] %s66
      %69 = dma.vmem_to_hbm [thread:$0]  %s67, 128, %s2, [#allocation4]
    $region21: #{tpu_custom_call.1} parent=1 // pred_fallthru
      _
    // Predicated region
    $region22: #{tpu_custom_call.1} parent=1 // pred_check
      _
    $region23: #{tpu_custom_call.1} parent=1 // pred_check_branch
      %71 = sbr.rel (0) target = $region25
    $region24: #{tpu_custom_call.1} parent=1 // pred_region
      %72 = dma.done [#allocation4], 128
    $region25: #{tpu_custom_call.1} parent=1 // pred_fallthru
      _
    %73 = vsyncpa [#allocation3], 1
    %74 = vsyncpa [#allocation4], 1
    %75 = vsyncpa [#allocation5], 1

</llo_original>
